<compile_context>
chip_gen: v7x
topology: tpu7x:2x2x1
jax: 0.10.0
libtpu: 0.0.40
codegen_flags: <defaults>
</compile_context>

<pallas_src>
import functools

import jax
import jax.numpy as jnp
from jax.experimental import pallas as pl
from jax.experimental.pallas import tpu as pltpu

_LANES = 128          # vreg lane width: keep the last dim lane-dense
_ACC_ROWS = 8         # sublane-aligned output block per split
_SPLITS = 2           # leading "parallel" grid axis (dual TensorCore on v7x)
_LOG_CLAMP = -100.0   # PyTorch clamps log terms at -100 to avoid -inf


def _bce_kernel(p_ref, t_ref, o_ref, acc_ref, *,
                neg_inv_count, rows, tile_rows, tiles_per_split, needs_mask):
    c = pl.program_id(0)          # split (TensorCore) index
    i = pl.program_id(1)          # tile index within the split (reduction axis)

    @pl.when(i == 0)
    def _():
        acc_ref[...] = jnp.zeros_like(acc_ref)

    p = p_ref[...].astype(jnp.float32)
    t = t_ref[...].astype(jnp.float32)
    # BCE per element: -(t*log(p) + (1-t)*log(1-p)), logs clamped at -100
    # (PyTorch semantics). Rewritten as t*(log_p - log_1mp) + log_1mp; the
    # negation is folded into the final neg_inv_count scale.
    log_p = jnp.maximum(jnp.log(p), _LOG_CLAMP)             # EUP
    log_1mp = jnp.maximum(jnp.log(1.0 - p), _LOG_CLAMP)     # EUP
    contrib = t * (log_p - log_1mp) + log_1mp               # VPU

    if needs_mask:
        # Zero out rows past the logical extent: the ragged last tile and the
        # (clamped) duplicate overhang block of the last split. where() blocks
        # NaN propagation from any unspecified padding data in partial blocks.
        nominal_block = c * tiles_per_split + i
        local_row = jax.lax.broadcasted_iota(jnp.int32, contrib.shape, 0)
        valid = (nominal_block * tile_rows + local_row) < rows
        contrib = jnp.where(valid, contrib, 0.0)

    # Lane-parallel partial sums; the single cross-lane reduce happens later.
    acc_ref[...] += jnp.sum(contrib, axis=0, keepdims=True)

    @pl.when(i == pl.num_programs(1) - 1)
    def _():
        row = jax.lax.broadcasted_iota(jnp.int32, (_ACC_ROWS, _LANES), 0)
        o_ref[...] = jnp.where(row == 0, acc_ref[...] * neg_inv_count, 0.0)


def bce_loss(y_pred, y_true, *, tile_rows=4096):
    """Mean binary cross entropy, matching torch.nn.BCELoss forward."""
    total = int(y_pred.size)
    p = y_pred.reshape(-1)
    t = y_true.reshape(-1)

    # Lane-dense (rows, 128) slab. Pure reshape when total % 128 == 0;
    # otherwise pad by < 128 zero-loss elements (pred=1, true=1) so the
    # reshape is possible (rare ragged path).
    rem = total % _LANES
    if rem:
        pad = _LANES - rem
        p = jnp.pad(p, (0, pad), constant_values=1)
        t = jnp.pad(t, (0, pad), constant_values=1)
    rows = (total + _LANES - 1) // _LANES
    p2 = p.reshape(rows, _LANES)
    t2 = t.reshape(rows, _LANES)

    if rows <= tile_rows:
        tile_rows = rows                             # single full-extent block
    else:
        tile_rows = max(8, (tile_rows // 8) * 8)     # (8,128)-aligned block
    n_tiles = (rows + tile_rows - 1) // tile_rows
    tiles_per_split = (n_tiles + _SPLITS - 1) // _SPLITS
    # Mask needed iff the grid nominally covers more rows than exist.
    needs_mask = (_SPLITS * tiles_per_split * tile_rows) != rows

    def in_map(c, i):
        # Clamp so the (possibly duplicated) overhang block of the last split
        # stays in bounds; the kernel's row mask zeroes its contribution.
        return (jnp.minimum(c * tiles_per_split + i, n_tiles - 1), 0)

    kernel = functools.partial(
        _bce_kernel,
        neg_inv_count=-1.0 / total,
        rows=rows,
        tile_rows=tile_rows,
        tiles_per_split=tiles_per_split,
        needs_mask=needs_mask,
    )
    bytes_per_elem = (jnp.dtype(y_pred.dtype).itemsize
                      + jnp.dtype(y_true.dtype).itemsize)
    partials = pl.pallas_call(
        kernel,
        out_shape=jax.ShapeDtypeStruct((_SPLITS * _ACC_ROWS, _LANES), jnp.float32),
        grid_spec=pltpu.PrefetchScalarGridSpec(
            num_scalar_prefetch=0,
            grid=(_SPLITS, tiles_per_split),
            in_specs=[pl.BlockSpec((tile_rows, _LANES), in_map),
                      pl.BlockSpec((tile_rows, _LANES), in_map)],
            out_specs=pl.BlockSpec((_ACC_ROWS, _LANES), lambda c, i: (c, 0)),
            scratch_shapes=[pltpu.VMEM((1, _LANES), jnp.float32)],
        ),
        compiler_params=pltpu.CompilerParams(
            dimension_semantics=("parallel", "arbitrary"),
            vmem_limit_bytes=32 * 1024 * 1024,
        ),
        cost_estimate=pl.CostEstimate(
            flops=6 * rows * _LANES,
            transcendentals=2 * rows * _LANES,
            bytes_accessed=rows * _LANES * bytes_per_elem
                           + _SPLITS * _ACC_ROWS * _LANES * 4,
        ),
    )(p2, t2)
    # All rows other than row 0 of each split's partial block are zero; one
    # tiny cross-lane reduce in the wrapper finishes the mean.
    return jnp.sum(partials)


def bce_loss_reference(y_pred, y_true):
    """Pure-JAX reference with PyTorch semantics (clamped logs, mean)."""
    p = y_pred.astype(jnp.float32)
    t = y_true.astype(jnp.float32)
    log_p = jnp.maximum(jnp.log(p), _LOG_CLAMP)
    log_1mp = jnp.maximum(jnp.log(1.0 - p), _LOG_CLAMP)
    return jnp.mean(-(t * log_p + (1.0 - t) * log_1mp))


if __name__ == "__main__":
    key = jax.random.PRNGKey(0)
    kp, kt = jax.random.split(key)
    shape = (2, 4, 16, 16)

    # y_pred must lie in (0, 1): sigmoid of random normals.
    y_pred = jax.nn.sigmoid(jax.random.normal(kp, shape, jnp.float32))
    # Targets in [0, 1]: Bernoulli(0.5) labels as f32.
    y_true = jax.random.bernoulli(kt, 0.5, shape).astype(jnp.float32)

    out = jax.block_until_ready(bce_loss(y_pred, y_true))
    ref = jax.block_until_ready(bce_loss_reference(y_pred, y_true))
    assert out.shape == (), out.shape
    assert jnp.allclose(out, ref, atol=1e-5, rtol=1e-5), (float(out), float(ref))

    # Ragged path (element count not a multiple of 128): exercises the
    # in-kernel row mask and the clamped duplicate overhang block.
    shape2 = (3, 5, 7)
    y_pred2 = jax.nn.sigmoid(jax.random.normal(kp, shape2, jnp.float32))
    y_true2 = jax.random.bernoulli(kt, 0.5, shape2).astype(jnp.float32)
    out2 = jax.block_until_ready(bce_loss(y_pred2, y_true2))
    ref2 = jax.block_until_ready(bce_loss_reference(y_pred2, y_true2))
    assert jnp.allclose(out2, ref2, atol=1e-5, rtol=1e-5), (float(out2), float(ref2))

    print("KERNEL_OK")
</pallas_src>

<mosaic_0001>
module attributes {stable_mosaic.version = 11 : i64} {
  func.func @_bce_kernel(%arg0: i32, %arg1: i32, %arg2: memref<16x128xf32, #tpu.memory_space<vmem>>, %arg3: memref<16x128xf32, #tpu.memory_space<vmem>>, %arg4: memref<8x128xf32, #tpu.memory_space<vmem>>, %arg5: memref<1x128xf32, #tpu.memory_space<vmem>>) attributes {dimension_semantics = [#tpu.dimension_semantics<parallel>, #tpu.dimension_semantics<arbitrary>], iteration_bounds = array<i64: 2, 1>, scalar_prefetch = 0 : i64, scratch_operands = 1 : i64, tpu.core_type = #tpu.core_type<tc>, window_params = [{transform_indices = @transform_0, window_bounds = array<i64: 16, 128>}, {transform_indices = @transform_1, window_bounds = array<i64: 16, 128>}, {transform_indices = @transform_2, window_bounds = array<i64: 8, 128>}]} {
    %c0_i32 = arith.constant 0 : i32
    %0 = arith.cmpi eq, %arg1, %c0_i32 : i32
    %1 = arith.extui %0 : i1 to i32
    %c0_i32_0 = arith.constant 0 : i32
    %2 = arith.cmpi ne, %1, %c0_i32_0 : i32
    scf.if %2 {
      %cst_15 = arith.constant 0.000000e+00 : f32
      %34 = vector.broadcast %cst_15 : f32 to vector<1x128xf32>
      %c0_16 = arith.constant 0 : index
      %c0_17 = arith.constant 0 : index
      %35 = vector.load %arg5[%c0_16, %c0_17] : memref<1x128xf32, #tpu.memory_space<vmem>>, vector<1x128xf32>
      tpu.vector_store %arg5[%c0_16, %c0_17], %34 {strides = array<i32>} : memref<1x128xf32, #tpu.memory_space<vmem>>, vector<1x128xf32>,
    } else {
    }
    %c0 = arith.constant 0 : index
    %c0_1 = arith.constant 0 : index
    %3 = vector.load %arg2[%c0, %c0_1] : memref<16x128xf32, #tpu.memory_space<vmem>>, vector<16x128xf32>
    %c0_2 = arith.constant 0 : index
    %c0_3 = arith.constant 0 : index
    %4 = vector.load %arg3[%c0_2, %c0_3] : memref<16x128xf32, #tpu.memory_space<vmem>>, vector<16x128xf32>
    %5 = math.log %3 : vector<16x128xf32>
    %cst = arith.constant -1.000000e+02 : f32
    %6 = vector.broadcast %cst : f32 to vector<16x128xf32>
    %7 = arith.maximumf %5, %6 : vector<16x128xf32>
    %cst_4 = arith.constant 1.000000e+00 : f32
    %8 = vector.broadcast %cst_4 : f32 to vector<16x128xf32>
    %9 = arith.subf %8, %3 : vector<16x128xf32>
    %10 = math.log %9 : vector<16x128xf32>
    %cst_5 = arith.constant -1.000000e+02 : f32
    %11 = vector.broadcast %cst_5 : f32 to vector<16x128xf32>
    %12 = arith.maximumf %10, %11 : vector<16x128xf32>
    %13 = arith.subf %7, %12 : vector<16x128xf32>
    %14 = arith.mulf %4, %13 : vector<16x128xf32>
    %15 = arith.addf %14, %12 : vector<16x128xf32>
    %c1_i32 = arith.constant 1 : i32
    %16 = arith.muli %arg0, %c1_i32 : i32
    %17 = arith.addi %16, %arg1 : i32
    %18 = tpu.iota {dimensions = array<i32: 0>} : vector<16x128xi32>
    %c16_i32 = arith.constant 16 : i32
    %19 = arith.muli %17, %c16_i32 : i32
    %20 = vector.broadcast %19 : i32 to vector<16x128xi32>
    %21 = arith.addi %20, %18 : vector<16x128xi32>
    %c16_i32_6 = arith.constant 16 : i32
    %22 = vector.broadcast %c16_i32_6 : i32 to vector<16x128xi32>
    %23 = arith.cmpi slt, %21, %22 : vector<16x128xi32>
    %cst_7 = arith.constant 0.000000e+00 : f32
    %24 = vector.broadcast %cst_7 : f32 to vector<16x128xf32>
    %25 = arith.select %23, %15, %24 : vector<16x128xi1>, vector<16x128xf32>
    %c0_8 = arith.constant 0 : index
    %c0_9 = arith.constant 0 : index
    %26 = vector.load %arg5[%c0_8, %c0_9] : memref<1x128xf32, #tpu.memory_space<vmem>>, vector<1x128xf32>
    %cst_10 = arith.constant dense<0.000000e+00> : vector<128xf32>
    %27 = vector.multi_reduction <add>, %25, %cst_10 [0] : vector<16x128xf32> to vector<128xf32>
    %28 = vector.shape_cast %27 : vector<128xf32> to vector<1x128xf32>
    %29 = arith.addf %26, %28 : vector<1x128xf32>
    %c0_11 = arith.constant 0 : index
    %c0_12 = arith.constant 0 : index
    %30 = vector.load %arg5[%c0_11, %c0_12] : memref<1x128xf32, #tpu.memory_space<vmem>>, vector<1x128xf32>
    tpu.vector_store %arg5[%c0_11, %c0_12], %29 {strides = array<i32>} : memref<1x128xf32, #tpu.memory_space<vmem>>, vector<1x128xf32>,
    %c0_i32_13 = arith.constant 0 : i32
    %31 = arith.cmpi eq, %arg1, %c0_i32_13 : i32
    %32 = arith.extui %31 : i1 to i32
    %c0_i32_14 = arith.constant 0 : i32
    %33 = arith.cmpi ne, %32, %c0_i32_14 : i32
    scf.if %33 {
      %34 = tpu.iota {dimensions = array<i32: 0>} : vector<8x128xi32>
      %c0_i32_15 = arith.constant 0 : i32
      %35 = vector.broadcast %c0_i32_15 : i32 to vector<8x128xi32>
      %36 = arith.cmpi eq, %34, %35 : vector<8x128xi32>
      %c0_16 = arith.constant 0 : index
      %c0_17 = arith.constant 0 : index
      %37 = vector.load %arg5[%c0_16, %c0_17] : memref<1x128xf32, #tpu.memory_space<vmem>>, vector<1x128xf32>
      %cst_18 = arith.constant -4.8828125E-4 : f32
      %38 = vector.broadcast %cst_18 : f32 to vector<1x128xf32>
      %39 = arith.mulf %37, %38 : vector<1x128xf32>
      %cst_19 = arith.constant 0.000000e+00 : f32
      %40 = vector.shape_cast %39 : vector<1x128xf32> to vector<1x128xf32>
      %41 = vector.broadcast %40 : vector<1x128xf32> to vector<8x128xf32>
      %42 = vector.broadcast %cst_19 : f32 to vector<8x128xf32>
      %43 = arith.select %36, %41, %42 : vector<8x128xi1>, vector<8x128xf32>
      %c0_20 = arith.constant 0 : index
      %c0_21 = arith.constant 0 : index
      %44 = vector.load %arg4[%c0_20, %c0_21] : memref<8x128xf32, #tpu.memory_space<vmem>>, vector<8x128xf32>
      tpu.vector_store %arg4[%c0_20, %c0_21], %43 {strides = array<i32>} : memref<8x128xf32, #tpu.memory_space<vmem>>, vector<8x128xf32>,
    } else {
    }
    return
  }
  func.func @transform_0(%arg0: i32, %arg1: i32) -> (i32, i32) {
    %c1_i32 = arith.constant 1 : i32
    %0 = arith.muli %arg0, %c1_i32 : i32
    %1 = arith.addi %0, %arg1 : i32
    %c0_i32 = arith.constant 0 : i32
    %2 = arith.minsi %1, %c0_i32 : i32
    %c0_i32_0 = arith.constant 0 : i32
    %c0_i32_1 = arith.constant 0 : i32
    return %2, %c0_i32_0 : i32, i32
  }
  func.func @transform_1(%arg0: i32, %arg1: i32) -> (i32, i32) {
    %c1_i32 = arith.constant 1 : i32
    %0 = arith.muli %arg0, %c1_i32 : i32
    %1 = arith.addi %0, %arg1 : i32
    %c0_i32 = arith.constant 0 : i32
    %2 = arith.minsi %1, %c0_i32 : i32
    %c0_i32_0 = arith.constant 0 : i32
    %c0_i32_1 = arith.constant 0 : i32
    return %2, %c0_i32_0 : i32, i32
  }
  func.func @transform_2(%arg0: i32, %arg1: i32) -> (i32, i32) {
    %c0_i32 = arith.constant 0 : i32
    %c0_i32_0 = arith.constant 0 : i32
    return %arg0, %c0_i32 : i32, i32
  }
}

</mosaic_0001>

<llo_original>
// kernel: tpu_custom_call.1
$region0: #{tpu_custom_call.1}
  #allocation0 [shape = 'u32[]', space=smem, size = 0x4, offset = 0x4, fixed_abs, tag = 'smem constant byte address 0x4 - core index']
  #allocation1 [shape = 'u32[144,128]{1,0:T(1,128)}', space=vmem, size = 0x12000, scoped, tag = 'internal scratch']
  #allocation2 [shape = 'f32[1,128]{1,0:T(1,128)}', space=vmem, size = 0x200, scoped, tag = 'scratch operand']
  %s0 = inlined_call_operand.hbm [shape: f32[16,128], index: 0, kind: input, shape index: {}]
  %s1 = inlined_call_operand.hbm [shape: f32[16,128], index: 1, kind: input, shape index: {}]
  %s2 = inlined_call_operand.hbm [shape: f32[16,128], index: 2, kind: output, shape index: {}]
  %s3 = sld [smem:[#allocation0]]
  $region57: #{tpu_custom_call.1} parent=0
    _
  %s5 = ssub.s32 1, %s3
  %s6 = scalar_select 0, %s5, %s3
  $region1: #{tpu_custom_call.1} parent=0
    #allocation3 [shape = 'u8[16384]{0}', space=vmem, size = 0x4000, scoped, tag = 'input window, operand 0']
    #allocation4 [shape = 's32[2]{0}', space=sflag, size = 0x8, scoped, tag = 'scoped memory for tpu_custom_call.1']
    #allocation5 [shape = 's32[2]{0}', space=sflag, size = 0x8, scoped, tag = 'scoped memory for tpu_custom_call.1']
    #allocation6 [shape = 'u8[16384]{0}', space=vmem, size = 0x4000, scoped, tag = 'input window, operand 1']
    #allocation7 [shape = 's32[2]{0}', space=sflag, size = 0x8, scoped, tag = 'scoped memory for tpu_custom_call.1']
    #allocation8 [shape = 'u8[8192]{0}', space=vmem, size = 0x2000, scoped, tag = 'output window, operand 0']
    %7 = vsyncpa [#allocation4], 0
    %s8 = scalar_lea.sflag [#allocation4], 1
    %9 = vsyncpa %s8, 0
    %10 = vsyncpa [#allocation7], 0
    %s11 = scalar_lea.sflag [#allocation7], 1
    %12 = vsyncpa %s11, 0
    %13 = vsyncpa [#allocation5], 0
    %s14 = scalar_lea.sflag [#allocation5], 1
    %15 = vsyncpa %s14, 0
    loop: start=0, step=1, limit=4
    $region2: #{tpu_custom_call.1} parent=1 // loop_pre_header
      _
    $region3: #{tpu_custom_call.1} parent=1 // loop_header
      %s17 = sphi 0, %s21
      %p18 = scmp.ge.s32.totalorder %s17, 4
      %s24 = sphi 0, %s36
      %s25 = sphi 0, %s32
      %s26 = sphi 0, %s24
      %s27 = sphi 0, %s25
      %s28 = sphi 0, %s26
      %s29 = sphi 0, %s27
      %s45 = sphi 0, %s47
      %s48 = sphi 0, %s45
      %s49 = sphi 0, %s48
      %s65 = sphi 0, %s49
      %s77 = sphi 0, %s79
      %s80 = sphi 0, %s77
      %s81 = sphi 0, %s80
      %s97 = sphi 0, %s81
      %s103 = sphi 0, %s105
      %s106 = sphi 0, %s103
      %s107 = sphi 0, %s106
      %s123 = sphi 0, %s107
    $region4: #{tpu_custom_call.1} parent=1 // loop_header_branch
      %20 = sbr.rel (%p18) target = $region8
    $region5: #{tpu_custom_call.1} parent=1 // loop_body
      %s22 = ssub.s32 %s17, 1
      %s23 = ssub.s32 %s17, 2
      %s30 = sadd.s32 1, %s25
      %p31 = scmp.ge.s32.totalorder %s30, 1
      %s32 = scalar_select %p31, 0, %s30
      %s33 = sadd.s32 1, %s24
      %s34 = scalar_select %p31, %s33, %s24
      %p35 = scmp.ge.s32.totalorder %s34, 2
      %s36 = scalar_select %p35, 0, %s34
      %s37 = sadd.s32 %s24, %s25
      %p38 = scmp.lt.s32.totalorder %s37, 0
      %s39 = scalar_select %p38, %s37, 0
      %s40 = sadd.s32 %s36, %s32
      %p41 = scmp.lt.s32.totalorder %s40, 0
      %s42 = scalar_select %p41, %s40, 0
      %s43 = ssub.s32 %s39, %s42
      %p44 = scmp.eq.s32.totalorder %s43, 0
      %s46 = sadd.s32 %s45, 1
      %s47 = scalar_select %p44, %s45, %s46
      %p50 = pneg %p44
      %p51 = scmp.eq.s32.totalorder %s17, 1
      %p52 = por %p50, %p51
      %p53 = scmp.ne.s32.totalorder %s45, %s48
      %p54 = scmp.eq.s32.totalorder %s17, 0
      %p55 = por %p53, %p54
      %p56 = scmp.ne.s32.totalorder %s45, %s48
      %p57 = scmp.eq.s32.totalorder %s22, 1
      %p58 = por %p56, %p57
      %p59 = scmp.ne.s32.totalorder %s48, %s49
      %p60 = scmp.eq.s32.totalorder %s22, 0
      %p61 = por %p59, %p60
      %p62 = scmp.ne.s32.totalorder %s48, %s49
      %p63 = scmp.eq.s32.totalorder %s23, 1
      %p64 = por %p62, %p63
      %p66 = scmp.ne.s32.totalorder %s49, %s65
      %p67 = scmp.eq.s32.totalorder %s23, 0
      %p68 = por %p66, %p67
      %s69 = sadd.s32 %s24, %s25
      %p70 = scmp.lt.s32.totalorder %s69, 0
      %s71 = scalar_select %p70, %s69, 0
      %s72 = sadd.s32 %s36, %s32
      %p73 = scmp.lt.s32.totalorder %s72, 0
      %s74 = scalar_select %p73, %s72, 0
      %s75 = ssub.s32 %s71, %s74
      %p76 = scmp.eq.s32.totalorder %s75, 0
      %s78 = sadd.s32 %s77, 1
      %s79 = scalar_select %p76, %s77, %s78
      %p82 = pneg %p76
      %p83 = scmp.eq.s32.totalorder %s17, 1
      %p84 = por %p82, %p83
      %p85 = scmp.ne.s32.totalorder %s77, %s80
      %p86 = scmp.eq.s32.totalorder %s17, 0
      %p87 = por %p85, %p86
      %p88 = scmp.ne.s32.totalorder %s77, %s80
      %p89 = scmp.eq.s32.totalorder %s22, 1
      %p90 = por %p88, %p89
      %p91 = scmp.ne.s32.totalorder %s80, %s81
      %p92 = scmp.eq.s32.totalorder %s22, 0
      %p93 = por %p91, %p92
      %p94 = scmp.ne.s32.totalorder %s80, %s81
      %p95 = scmp.eq.s32.totalorder %s23, 1
      %p96 = por %p94, %p95
      %p98 = scmp.ne.s32.totalorder %s81, %s97
      %p99 = scmp.eq.s32.totalorder %s23, 0
      %p100 = por %p98, %p99
      %s101 = ssub.s32 %s24, %s36
      %p102 = scmp.eq.s32.totalorder %s101, 0
      %s104 = sadd.s32 %s103, 1
      %s105 = scalar_select %p102, %s103, %s104
      %p108 = pneg %p102
      %p109 = scmp.eq.s32.totalorder %s17, 1
      %p110 = por %p108, %p109
      %p111 = scmp.ne.s32.totalorder %s103, %s106
      %p112 = scmp.eq.s32.totalorder %s17, 0
      %p113 = por %p111, %p112
      %p114 = scmp.ne.s32.totalorder %s103, %s106
      %p115 = scmp.eq.s32.totalorder %s22, 1
      %p116 = por %p114, %p115
      %p117 = scmp.ne.s32.totalorder %s106, %s107
      %p118 = scmp.eq.s32.totalorder %s22, 0
      %p119 = por %p117, %p118
      %p120 = scmp.ne.s32.totalorder %s106, %s107
      %p121 = scmp.eq.s32.totalorder %s23, 1
      %p122 = por %p120, %p121
      %p124 = scmp.ne.s32.totalorder %s107, %s123
      %p125 = scmp.eq.s32.totalorder %s23, 0
      %p126 = por %p124, %p125
      %p127 = scmp.le.s32.totalorder 1, %s17
      %p128 = scmp.lt.s32.totalorder %s17, 3
      %p129 = pnand %p127, %p128
      %p130 = pneg %p129
      // Predicated region
      $region9: #{tpu_custom_call.1} parent=5 // pred_check
        _
      $region10: #{tpu_custom_call.1} parent=5 // pred_check_branch
        %132 = sbr.rel (%p129) target = $region12
      $region11: #{tpu_custom_call.1} parent=5 // pred_region
        %s133 = ssub.s32 %s17, 1
      $region12: #{tpu_custom_call.1} parent=5 // pred_fallthru
        _
      %p134 = scmp.lt.s32.totalorder %s17, 2
      // Predicated region
      $region13: #{tpu_custom_call.1} parent=5 // pred_check
        %p135 = pneg %p134
      $region14: #{tpu_custom_call.1} parent=5 // pred_check_branch
        %137 = sbr.rel (%p135) target = $region16
      $region15: #{tpu_custom_call.1} parent=5 // pred_region
        // Predicated region
        $region17: #{tpu_custom_call.1} parent=15 // pred_check
          %p138 = pneg %p55
        $region18: #{tpu_custom_call.1} parent=15 // pred_check_branch
          %140 = sbr.rel (%p138) target = $region20
        $region19: #{tpu_custom_call.1} parent=15 // pred_region
          %s141 = sand.u32 %s45, 1
          %s142 = scalar_lea.sflag [#allocation4], %s141
          %s143 = sand.u32 %s45, 1
          %s144 = smul.addr %s143, 16
          %s145 = scalar_lea.vmem [#allocation3], %s144
          %s146 = sadd.s32 %s24, %s25
          %p147 = scmp.lt.s32.totalorder %s146, 0
          %s148 = scalar_select %p147, %s146, 0
          %s149 = smul.u32 2, %s148
          %s151 = ssub.s32 256, 256
          %152 = vsyncadd %s142, %s151
          %s153 = smul.addr %s149, 128
          %s154 = scalar_lea.hbm %s0, %s153
          %s155 = sshll.u32 %s145, 4
          %s156 = int_to_ptr.vmem [resolvable:$true] %s155
          %161 = dma.hbm_to_vmem [thread:$0]  %s154, 256, %s156, %s142, 128, 128, 8
        $region20: #{tpu_custom_call.1} parent=15 // pred_fallthru
          _
        // Predicated region
        $region21: #{tpu_custom_call.1} parent=15 // pred_check
          %p162 = pneg %p87
        $region22: #{tpu_custom_call.1} parent=15 // pred_check_branch
          %164 = sbr.rel (%p162) target = $region24
        $region23: #{tpu_custom_call.1} parent=15 // pred_region
          %s165 = sand.u32 %s77, 1
          %s166 = scalar_lea.sflag [#allocation7], %s165
          %s167 = sand.u32 %s77, 1
          %s168 = smul.addr %s167, 16
          %s169 = scalar_lea.vmem [#allocation6], %s168
          %s170 = sadd.s32 %s24, %s25
          %p171 = scmp.lt.s32.totalorder %s170, 0
          %s172 = scalar_select %p171, %s170, 0
          %s173 = smul.u32 2, %s172
          %s175 = ssub.s32 256, 256
          %176 = vsyncadd %s166, %s175
          %s177 = smul.addr %s173, 128
          %s178 = scalar_lea.hbm %s1, %s177
          %s179 = sshll.u32 %s169, 4
          %s180 = int_to_ptr.vmem [resolvable:$true] %s179
          %185 = dma.hbm_to_vmem [thread:$0]  %s178, 256, %s180, %s166, 128, 128, 8
        $region24: #{tpu_custom_call.1} parent=15 // pred_fallthru
          _
      $region16: #{tpu_custom_call.1} parent=5 // pred_fallthru
        _
      %p186 = scmp.le.s32.totalorder 1, %s17
      %p187 = scmp.lt.s32.totalorder %s17, 3
      %p188 = pnand %p186, %p187
      %p189 = pneg %p188
      // Predicated region
      $region25: #{tpu_custom_call.1} parent=5 // pred_check
        _
      $region26: #{tpu_custom_call.1} parent=5 // pred_check_branch
        %191 = sbr.rel (%p188) target = $region28
      $region27: #{tpu_custom_call.1} parent=5 // pred_region
        %s192 = ssub.s32 %s17, 1
        %s193 = sand.u32 %s48, 1
        %s194 = scalar_lea.sflag [#allocation4], %s193
        %s195 = sand.u32 %s48, 1
        %s196 = smul.addr %s195, 16
        %s197 = scalar_lea.vmem [#allocation3], %s196
        // Predicated region
        $region29: #{tpu_custom_call.1} parent=27 // pred_check
          %p198 = pneg %p61
        $region30: #{tpu_custom_call.1} parent=27 // pred_check_branch
          %200 = sbr.rel (%p198) target = $region32
        $region31: #{tpu_custom_call.1} parent=27 // pred_region
          %201 = dma.done %s194, 256
        $region32: #{tpu_custom_call.1} parent=27 // pred_fallthru
          _
        %s202 = sand.u32 %s80, 1
        %s203 = scalar_lea.sflag [#allocation7], %s202
        %s204 = sand.u32 %s80, 1
        %s205 = smul.addr %s204, 16
        %s206 = scalar_lea.vmem [#allocation6], %s205
        // Predicated region
        $region33: #{tpu_custom_call.1} parent=27 // pred_check
          %p207 = pneg %p93
        $region34: #{tpu_custom_call.1} parent=27 // pred_check_branch
          %209 = sbr.rel (%p207) target = $region36
        $region35: #{tpu_custom_call.1} parent=27 // pred_region
          %210 = dma.done %s203, 256
        $region36: #{tpu_custom_call.1} parent=27 // pred_fallthru
          _
        %s211 = sand.u32 %s48, 1
        %s212 = scalar_lea.sflag [#allocation4], %s211
        %s213 = sand.u32 %s48, 1
        %s214 = smul.addr %s213, 16
        %s215 = scalar_lea.vmem [#allocation3], %s214
        %p216 = pneg %p61
        %p217 = pneg %p58
        %s218 = sand.u32 %s80, 1
        %s219 = scalar_lea.sflag [#allocation7], %s218
        %s220 = sand.u32 %s80, 1
        %s221 = smul.addr %s220, 16
        %s222 = scalar_lea.vmem [#allocation6], %s221
        %p223 = pneg %p93
        %p224 = pneg %p90
        %p225 = pneg %p119
        %p226 = pneg %p116
        %s227 = sand.u32 %s106, 1
        %s228 = scalar_lea.sflag [#allocation5], %s227
        %s229 = sand.u32 %s106, 1
        %s230 = smul.addr %s229, 8
        %s231 = scalar_lea.vmem [#allocation8], %s230
        %s232 = sadd.s32 %s26, %s27
        %p233 = scmp.lt.s32.totalorder %s232, 0
        %s234 = scalar_select %p233, %s232, 0
        %s235 = smul.u32 2, %s234
        %s236 = sadd.s32 %s26, %s27
        %p237 = scmp.lt.s32.totalorder %s236, 0
        %s238 = scalar_select %p237, %s236, 0
        %s239 = smul.u32 2, %s238
        %p240 = scmp.eq.s32.totalorder %s27, 0
        // Predicated region
        $region37: #{tpu_custom_call.1} parent=27 // pred_check
          %p241 = pneg %p240
        $region38: #{tpu_custom_call.1} parent=27 // pred_check_branch
          %243 = sbr.rel (%p241) target = $region40
        $region39: #{tpu_custom_call.1} parent=27 // pred_region
          %244 = vst [vmem:[#allocation2] sm:$0x1] 0.0
        $region40: #{tpu_custom_call.1} parent=27 // pred_fallthru
          _
        %v245 = vld [vmem:[%s197] sm:$0xff]
        %v246 = vld [vmem:[%s197 + $0x8] sm:$0xff]
        %v247 = vld [vmem:[%s206] sm:$0xff]
        %v248 = vld [vmem:[%s206 + $0x8] sm:$0xff]
        %v249 = vlog2.pop %v245
        %v250 = vmul.f32 %v249, 0.6931472
        %v251 = vlog2.pop %v246
        %v252 = vmul.f32 %v251, 0.6931472
        %v253 = vmax.f32 %v250, -100.0
        %v254 = vmax.f32 %v252, -100.0
        %v255 = vsub.f32 1.0, %v245
        %v256 = vsub.f32 1.0, %v246
        %v257 = vlog2.pop %v255
        %v258 = vmul.f32 %v257, 0.6931472
        %v259 = vlog2.pop %v256
        %v260 = vmul.f32 %v259, 0.6931472
        %v261 = vmax.f32 %v258, -100.0
        %v262 = vmax.f32 %v260, -100.0
        %v263 = vsub.f32 %v253, %v261
        %v264 = vsub.f32 %v254, %v262
        %v265 = vmul.f32 %v247, %v263
        %v266 = vmul.f32 %v248, %v264
        %v267 = vadd.f32 %v265, %v261
        %v268 = vadd.f32 %v266, %v262
        %s269 = sadd.s32 %s26, %s27
        %v270 = vlaneseq
        %v271 = vshrl.u32 %v270, 7
        %v272 = vadd.s32 %v271, 8
        %s273 = smul.u32 %s269, 16
        %v274 = vstv %s273
        %v275 = vadd.s32 %v274, %v271
        %v276 = vadd.s32 %v274, %v272
        %vm277 = vcmp.lt.s32.totalorder %v275, 16
        %vm278 = vcmp.lt.s32.totalorder %v276, 16
        %v279 = vsel %vm277, %v267, 0.0
        %v280 = vsel %vm278, %v268, 0.0
        %v281 = vld [vmem:[#allocation2] sm:$0x1]
        %v282 = vadd.f32 %v279, %v280
        %v283 = vrot.slane %v282, 4
        %v284 = vadd.f32 %v282, %v283
        %v285 = vrot.slane %v284, 2
        %v286 = vadd.f32 %v284, %v285
        %v287 = vrot.slane %v286, 1
        %v288 = vadd.f32 %v286, %v287
        %v289 = vadd.f32 %v281, %v288
        %290 = vst [vmem:[#allocation2] sm:$0x1] %v289
        // Predicated region
        $region41: #{tpu_custom_call.1} parent=27 // pred_check
          %p291 = pneg %p240
        $region42: #{tpu_custom_call.1} parent=27 // pred_check_branch
          %293 = sbr.rel (%p291) target = $region44
        $region43: #{tpu_custom_call.1} parent=27 // pred_region
          %vm294 = vcmp.eq.s32.totalorder %v271, 0
          %v295 = vld [vmem:[#allocation2] sm:$0x1]
          %v296 = vmul.f32 %v295, -0.00048828125
          %v298 = vlaneseq
          %v299 = vshrl.u32 %v298, 7
          %v300 = vsub.s32 0, %v299
          %v301 = vrot.slane %v296, %v300
          %v303 = vsel %vm294, %v301, 0.0
          %304 = vst [vmem:[%s231] sm:$0xff] %v303
        $region44: #{tpu_custom_call.1} parent=27 // pred_fallthru
          _
        %s305 = sand.u32 %s106, 1
        %s306 = scalar_lea.sflag [#allocation5], %s305
        %s307 = sand.u32 %s106, 1
        %s308 = smul.addr %s307, 8
        %s309 = scalar_lea.vmem [#allocation8], %s308
        // Predicated region
        $region45: #{tpu_custom_call.1} parent=27 // pred_check
          %p310 = pneg %p116
        $region46: #{tpu_custom_call.1} parent=27 // pred_check_branch
          %312 = sbr.rel (%p310) target = $region48
        $region47: #{tpu_custom_call.1} parent=27 // pred_region
          %s314 = ssub.s32 128, 128
          %315 = vsyncadd %s306, %s314
          %s316 = smul.addr %s26, 128
          %s317 = scalar_lea.hbm %s2, %s316
          %s319 = sshll.u32 %s309, 4
          %s320 = int_to_ptr.vmem [resolvable:$true] %s319
          %322 = dma.vmem_to_hbm [thread:$0]  %s320, 128, %s317, %s306
        $region48: #{tpu_custom_call.1} parent=27 // pred_fallthru
          _
      $region28: #{tpu_custom_call.1} parent=5 // pred_fallthru
        _
      %p323 = scmp.le.s32.totalorder 2, %s17
      // Predicated region
      $region49: #{tpu_custom_call.1} parent=5 // pred_check
        %p324 = pneg %p323
      $region50: #{tpu_custom_call.1} parent=5 // pred_check_branch
        %326 = sbr.rel (%p324) target = $region52
      $region51: #{tpu_custom_call.1} parent=5 // pred_region
        %s327 = ssub.s32 %s17, 2
        // Predicated region
        $region53: #{tpu_custom_call.1} parent=51 // pred_check
          %p328 = pneg %p122
        $region54: #{tpu_custom_call.1} parent=51 // pred_check_branch
          %330 = sbr.rel (%p328) target = $region56
        $region55: #{tpu_custom_call.1} parent=51 // pred_region
          %s331 = sand.u32 %s107, 1
          %s332 = scalar_lea.sflag [#allocation5], %s331
          %s333 = sand.u32 %s107, 1
          %s334 = smul.addr %s333, 8
          %s335 = scalar_lea.vmem [#allocation8], %s334
          %336 = dma.done %s332, 128
        $region56: #{tpu_custom_call.1} parent=51 // pred_fallthru
          _
      $region52: #{tpu_custom_call.1} parent=5 // pred_fallthru
        _
    $region6: #{tpu_custom_call.1} parent=1 // loop_footer
      %s21 = sadd.s32 1, %s17
    $region7: #{tpu_custom_call.1} parent=1 // loop_footer_branch
      %16 = sbr.rel target = $region3
    $region8: #{tpu_custom_call.1} parent=1 // loop_exit
      _
    %337 = vsyncpa [#allocation4], 1
    %s338 = scalar_lea.sflag [#allocation4], 1
    %339 = vsyncpa %s338, 1
    %340 = vsyncpa [#allocation7], 1
    %s341 = scalar_lea.sflag [#allocation7], 1
    %342 = vsyncpa %s341, 1
    %343 = vsyncpa [#allocation5], 1
    %s344 = scalar_lea.sflag [#allocation5], 1
    %345 = vsyncpa %s344, 1

</llo_original>
